<compile_context>
chip_gen: v6e
topology: v6e:2x2x1
jax: 0.10.0
libtpu: 0.0.40
codegen_flags: <defaults>
</compile_context>

<pallas_src>
import math

import jax
import jax.numpy as jnp
from jax.experimental import pallas as pl
from jax.experimental.pallas import tpu as pltpu

_FIELD_BITS = 3                       # labels in [0, 5): 3 bits per packed field
_FIELD_MASK = (1 << _FIELD_BITS) - 1


def _round_up(x, m):
    return ((x + m - 1) // m) * m


def _make_kernel(groups, feat):
    def kernel(code_ref, wtb_ref, o_ref):
        # code_ref: (TR, 1) int32 -- G labels bit-packed per output row.
        # wtb_ref : (5, L)  f32   -- W^T tiled over the G slots, bias folded in.
        # o_ref   : (TR, L) f32   -- G tokens' F-wide embeddings per row.
        tr, l = o_ref.shape

        # Per-lane constants (a single (1, L) row reused by every chunk):
        # the in-place mask of this lane's 3-bit field and the field's LSB
        # weight (class targets are then c * base).  Built with compares only
        # (no variable shifts / divides) so lowering is trivial.
        lane = jax.lax.broadcasted_iota(jnp.int32, (1, l), 1)
        maskpat = jnp.full((1, l), _FIELD_MASK, jnp.int32)
        base = jnp.ones((1, l), jnp.int32)
        for g in range(1, groups):
            in_g = lane >= g * feat
            maskpat = jnp.where(in_g, _FIELD_MASK << (_FIELD_BITS * g), maskpat)
            base = jnp.where(in_g, 1 << (_FIELD_BITS * g), base)

        code = code_ref[...]                       # (tr, 1) packed labels
        key = code & maskpat                       # (tr, l) per-lane label, in place

        wtb = wtb_ref[...]                         # (5, l), bias folded in
        # Init from class 0's row (drops the zeros init and one compare+select);
        # then 4 compare+selects for classes 1..4.
        out = jnp.broadcast_to(wtb[0:1, :], (tr, l))
        for c in range(1, 5):
            out = jnp.where(key == c * base, wtb[c:c + 1, :], out)
        o_ref[...] = out

    return kernel


@jax.jit
def label2vec(X, W, b):
    """X: (B, S) int labels in [0, 5); W: (F, 5); b: (F,) -> (B, S, F) f32."""
    B, S = X.shape
    F = int(W.shape[0])
    M = B * S

    # Pack G tokens per output row so stores are (a multiple of) 128 lanes.
    if F % 128 == 0:
        G = 1
    elif 128 % F == 0:
        G = 128 // F
    else:
        G = math.lcm(F, 128) // F
    if G > 8:
        # TODO(synk): F < 16 (or awkward F) falls back to fewer tokens per row
        # and hence narrower / partially masked stores.
        G = 8
    L = G * F

    labels = jnp.clip(X.reshape(M).astype(jnp.int32), 0, 4)
    Mp = _round_up(M, G)
    if Mp != M:
        labels = jnp.pad(labels, (0, Mp - M))      # pad tail with class 0
    R = Mp // G

    # One packed int32 code per output row (3 bits per token label).
    shifts = _FIELD_BITS * jnp.arange(G, dtype=jnp.int32)
    codes = jnp.sum(labels.reshape(R, G) << shifts[None, :], axis=1,
                    dtype=jnp.int32).reshape(R, 1)

    # Bias-folded lookup table, tiled across the G token slots of a row.
    wt = jnp.asarray(W, jnp.float32).T                              # (5, F)
    wtb = (jnp.tile(wt, (1, G)) +
           jnp.tile(jnp.asarray(b, jnp.float32).reshape(1, F), (1, G)))  # (5, L)

    # Row-tile policy: ~8 MiB of f32 output per step, but keep >=8 steps when
    # possible (so both v7x TensorCores get pipelined work), never < ~2 MiB.
    row_bytes = L * 4
    tr_target = max(8, ((8 << 20) // row_bytes) // 8 * 8)
    tr_floor = max(8, ((2 << 20) // row_bytes) // 8 * 8)
    tr_steps = _round_up(-(-R // 8), 8)
    TR = min(tr_target, max(tr_floor, tr_steps))
    if TR >= R:
        TR = R                                    # block == full dims, 1 step
        steps = 1
    else:
        steps = -(-R // TR)                       # ragged last block is masked

    # VMEM budget: double-buffered output + packed-code block (the (TR, 1)
    # int32 block lane-pads to (TR, 128) in VMEM -> TR*512 B) + the table.
    need = 2 * (TR * row_bytes + TR * 128 * 4 + 5 * L * 4)
    vmem_limit = int(min(48 << 20, max(32 << 20, need + (4 << 20))))

    out = pl.pallas_call(
        _make_kernel(G, F),
        out_shape=jax.ShapeDtypeStruct((R, L), jnp.float32),
        grid=(steps,),
        in_specs=[
            pl.BlockSpec((TR, 1), lambda i: (i, 0)),   # packed labels
            pl.BlockSpec((5, L), lambda i: (0, 0)),    # table, resident
        ],
        out_specs=pl.BlockSpec((TR, L), lambda i: (i, 0)),
        compiler_params=pltpu.CompilerParams(
            dimension_semantics=("parallel",),         # split row tiles on v7x
            vmem_limit_bytes=vmem_limit),
    )(codes, wtb)

    out = out.reshape(Mp, F)
    if Mp != M:
        # TODO(synk): only hit when (B*S) % G != 0; this slice materializes a
        # copy.  The common case (Mp == M) returns with free reshapes only.
        out = out[:M]
    return out.reshape(B, S, F)


if __name__ == "__main__":
    # Small shapes consistent with the module: batch=2, seq=8, features=32;
    # the vocabulary is fixed at 5 by nn.Linear(5, features).
    B, S, F = 2, 8, 32

    key = jax.random.PRNGKey(0)
    kx, kw, kb = jax.random.split(key, 3)

    # Deterministic "Linear(5, F)" parameters (PyTorch-style uniform init).
    bound = 1.0 / jnp.sqrt(5.0)
    W = jax.random.uniform(kw, (F, 5), jnp.float32, minval=-bound, maxval=bound)
    b = jax.random.uniform(kb, (F,), jnp.float32, minval=-bound, maxval=bound)

    # Integer labels in [0, 5), as expected by one_hot(X, 5).
    X = jax.random.randint(kx, (B, S), 0, 5, dtype=jnp.int32)

    out = label2vec(X, W, b)
    jax.block_until_ready(out)

    # Reference check in plain JAX (one-hot + linear == table row + bias).
    ref = (jax.nn.one_hot(X, 5, dtype=jnp.float32).reshape(B * S, 5) @ W.T
           + b).reshape(B, S, F)
    assert out.shape == (B, S, F)
    assert jnp.allclose(out, ref, atol=1e-5, rtol=1e-5)

    print("KERNEL_OK")
</pallas_src>

<mosaic_0001>
module attributes {stable_mosaic.version = 11 : i64} {
  func.func @kernel(%arg0: i32, %arg1: memref<4x1xi32, #tpu.memory_space<vmem>>, %arg2: memref<5x128xf32, #tpu.memory_space<vmem>>, %arg3: memref<4x128xf32, #tpu.memory_space<vmem>>) attributes {dimension_semantics = [#tpu.dimension_semantics<parallel>], iteration_bounds = array<i64: 1>, scalar_prefetch = 0 : i64, scratch_operands = 0 : i64, tpu.core_type = #tpu.core_type<tc>, window_params = [{transform_indices = @transform_0, window_bounds = array<i64: 4, 1>}, {pipeline_mode = #tpu.pipeline_mode<synchronous>, transform_indices = @transform_1, window_bounds = array<i64: 5, 128>}, {transform_indices = @transform_2, window_bounds = array<i64: 4, 128>}]} {
    %0 = tpu.iota {dimensions = array<i32: 1>} : vector<1x128xi32>
    %c7_i32 = arith.constant 7 : i32
    %1 = vector.broadcast %c7_i32 : i32 to vector<1x128xi32>
    %c1_i32 = arith.constant 1 : i32
    %2 = vector.broadcast %c1_i32 : i32 to vector<1x128xi32>
    %c32_i32 = arith.constant 32 : i32
    %3 = vector.broadcast %c32_i32 : i32 to vector<1x128xi32>
    %4 = arith.cmpi sge, %0, %3 : vector<1x128xi32>
    %c56_i32 = arith.constant 56 : i32
    %5 = vector.broadcast %c56_i32 : i32 to vector<1x128xi32>
    %6 = arith.select %4, %5, %1 : vector<1x128xi1>, vector<1x128xi32>
    %c8_i32 = arith.constant 8 : i32
    %7 = vector.broadcast %c8_i32 : i32 to vector<1x128xi32>
    %8 = arith.select %4, %7, %2 : vector<1x128xi1>, vector<1x128xi32>
    %c64_i32 = arith.constant 64 : i32
    %9 = vector.broadcast %c64_i32 : i32 to vector<1x128xi32>
    %10 = arith.cmpi sge, %0, %9 : vector<1x128xi32>
    %c448_i32 = arith.constant 448 : i32
    %11 = vector.broadcast %c448_i32 : i32 to vector<1x128xi32>
    %12 = arith.select %10, %11, %6 : vector<1x128xi1>, vector<1x128xi32>
    %c64_i32_0 = arith.constant 64 : i32
    %13 = vector.broadcast %c64_i32_0 : i32 to vector<1x128xi32>
    %14 = arith.select %10, %13, %8 : vector<1x128xi1>, vector<1x128xi32>
    %c96_i32 = arith.constant 96 : i32
    %15 = vector.broadcast %c96_i32 : i32 to vector<1x128xi32>
    %16 = arith.cmpi sge, %0, %15 : vector<1x128xi32>
    %c3584_i32 = arith.constant 3584 : i32
    %17 = vector.broadcast %c3584_i32 : i32 to vector<1x128xi32>
    %18 = arith.select %16, %17, %12 : vector<1x128xi1>, vector<1x128xi32>
    %c512_i32 = arith.constant 512 : i32
    %19 = vector.broadcast %c512_i32 : i32 to vector<1x128xi32>
    %20 = arith.select %16, %19, %14 : vector<1x128xi1>, vector<1x128xi32>
    %c0 = arith.constant 0 : index
    %c0_1 = arith.constant 0 : index
    %21 = vector.load %arg1[%c0, %c0_1] : memref<4x1xi32, #tpu.memory_space<vmem>>, vector<4x1xi32>
    %22 = vector.broadcast %21 : vector<4x1xi32> to vector<4x128xi32>
    %23 = vector.broadcast %18 : vector<1x128xi32> to vector<4x128xi32>
    %24 = arith.andi %22, %23 : vector<4x128xi32>
    %c0_2 = arith.constant 0 : index
    %c0_3 = arith.constant 0 : index
    %25 = vector.load %arg2[%c0_2, %c0_3] : memref<5x128xf32, #tpu.memory_space<vmem>>, vector<5x128xf32>
    %26 = vector.extract_strided_slice %25 {offsets = [0, 0], sizes = [1, 128], strides = [1, 1]} : vector<5x128xf32> to vector<1x128xf32>
    %27 = vector.shape_cast %26 : vector<1x128xf32> to vector<1x128xf32>
    %28 = vector.broadcast %27 : vector<1x128xf32> to vector<4x128xf32>
    %c1_i32_4 = arith.constant 1 : i32
    %29 = vector.broadcast %c1_i32_4 : i32 to vector<1x128xi32>
    %30 = arith.muli %29, %20 : vector<1x128xi32>
    %31 = vector.broadcast %30 : vector<1x128xi32> to vector<4x128xi32>
    %32 = arith.cmpi eq, %24, %31 : vector<4x128xi32>
    %33 = vector.extract_strided_slice %25 {offsets = [1, 0], sizes = [1, 128], strides = [1, 1]} : vector<5x128xf32> to vector<1x128xf32>
    %34 = vector.shape_cast %33 : vector<1x128xf32> to vector<1x128xf32>
    %35 = vector.broadcast %34 : vector<1x128xf32> to vector<4x128xf32>
    %36 = arith.select %32, %35, %28 : vector<4x128xi1>, vector<4x128xf32>
    %c2_i32 = arith.constant 2 : i32
    %37 = vector.broadcast %c2_i32 : i32 to vector<1x128xi32>
    %38 = arith.muli %37, %20 : vector<1x128xi32>
    %39 = vector.broadcast %38 : vector<1x128xi32> to vector<4x128xi32>
    %40 = arith.cmpi eq, %24, %39 : vector<4x128xi32>
    %41 = vector.extract_strided_slice %25 {offsets = [2, 0], sizes = [1, 128], strides = [1, 1]} : vector<5x128xf32> to vector<1x128xf32>
    %42 = vector.shape_cast %41 : vector<1x128xf32> to vector<1x128xf32>
    %43 = vector.broadcast %42 : vector<1x128xf32> to vector<4x128xf32>
    %44 = arith.select %40, %43, %36 : vector<4x128xi1>, vector<4x128xf32>
    %c3_i32 = arith.constant 3 : i32
    %45 = vector.broadcast %c3_i32 : i32 to vector<1x128xi32>
    %46 = arith.muli %45, %20 : vector<1x128xi32>
    %47 = vector.broadcast %46 : vector<1x128xi32> to vector<4x128xi32>
    %48 = arith.cmpi eq, %24, %47 : vector<4x128xi32>
    %49 = vector.extract_strided_slice %25 {offsets = [3, 0], sizes = [1, 128], strides = [1, 1]} : vector<5x128xf32> to vector<1x128xf32>
    %50 = vector.shape_cast %49 : vector<1x128xf32> to vector<1x128xf32>
    %51 = vector.broadcast %50 : vector<1x128xf32> to vector<4x128xf32>
    %52 = arith.select %48, %51, %44 : vector<4x128xi1>, vector<4x128xf32>
    %c4_i32 = arith.constant 4 : i32
    %53 = vector.broadcast %c4_i32 : i32 to vector<1x128xi32>
    %54 = arith.muli %53, %20 : vector<1x128xi32>
    %55 = vector.broadcast %54 : vector<1x128xi32> to vector<4x128xi32>
    %56 = arith.cmpi eq, %24, %55 : vector<4x128xi32>
    %57 = vector.extract_strided_slice %25 {offsets = [4, 0], sizes = [1, 128], strides = [1, 1]} : vector<5x128xf32> to vector<1x128xf32>
    %58 = vector.shape_cast %57 : vector<1x128xf32> to vector<1x128xf32>
    %59 = vector.broadcast %58 : vector<1x128xf32> to vector<4x128xf32>
    %60 = arith.select %56, %59, %52 : vector<4x128xi1>, vector<4x128xf32>
    %c0_5 = arith.constant 0 : index
    %c0_6 = arith.constant 0 : index
    %61 = vector.load %arg3[%c0_5, %c0_6] : memref<4x128xf32, #tpu.memory_space<vmem>>, vector<4x128xf32>
    tpu.vector_store %arg3[%c0_5, %c0_6], %60 {strides = array<i32>} : memref<4x128xf32, #tpu.memory_space<vmem>>, vector<4x128xf32>,
    return
  }
  func.func @transform_0(%arg0: i32) -> (i32, i32) {
    %c0_i32 = arith.constant 0 : i32
    %c0_i32_0 = arith.constant 0 : i32
    return %arg0, %c0_i32 : i32, i32
  }
  func.func @transform_1(%arg0: i32) -> (i32, i32) {
    %c0_i32 = arith.constant 0 : i32
    %c0_i32_0 = arith.constant 0 : i32
    %c0_i32_1 = arith.constant 0 : i32
    return %c0_i32, %c0_i32_0 : i32, i32
  }
  func.func @transform_2(%arg0: i32) -> (i32, i32) {
    %c0_i32 = arith.constant 0 : i32
    %c0_i32_0 = arith.constant 0 : i32
    return %arg0, %c0_i32 : i32, i32
  }
}

</mosaic_0001>

<llo_original>
// kernel: tile.13
$region0: #{tile.13}
  %s0 = inlined_call_operand.vmem [shape: f32[5,4,32], index: 0, kind: input, shape index: {}]
  %s1 = inlined_call_operand.vmem [shape: f32[5,128], index: 1, kind: output, shape index: {}]
  $region1: #{tile.13} parent=0
    #allocation0 [shape = 'u8[20480]{0}', space=vmem, size = 0x5000, scoped, tag = 'scoped mem for input reshape']
    %s3 = sshll.u32 1, 4
    %s4 = ssub.s32 %s3, 1
    %s5 = smul.addr 4, 4
    %s6 = scalar_lea.vmem %s0, %s5
    %v7 = vld [vmem:[%s6] sm:%s4]
    %s8 = scalar_lea.vmem [#allocation0], 32
    %9 = vst [vmem:[%s8] sm:%s4] %v7
    %s10 = smul.addr 4, 3
    %s11 = scalar_lea.vmem %s0, %s10
    %v12 = vld [vmem:[%s11] sm:%s4]
    %s13 = scalar_lea.vmem [#allocation0], 24
    %14 = vst [vmem:[%s13] sm:%s4] %v12
    %s15 = smul.addr 4, 2
    %s16 = scalar_lea.vmem %s0, %s15
    %v17 = vld [vmem:[%s16] sm:%s4]
    %s18 = scalar_lea.vmem [#allocation0], 16
    %19 = vst [vmem:[%s18] sm:%s4] %v17
    %s20 = scalar_lea.vmem %s0, 4
    %v21 = vld [vmem:[%s20] sm:%s4]
    %s22 = scalar_lea.vmem [#allocation0], 8
    %23 = vst [vmem:[%s22] sm:%s4] %v21
    %v24 = vld [vmem:[%s0] sm:%s4]
    %25 = vst [vmem:[#allocation0] sm:%s4] %v24
    %v26 = vld [vmem:[#allocation0] ss:$8 sm:$0xf]
    %s27 = scalar_lea.vmem [#allocation0], 28
    %v28 = vld [vmem:[%s27] sm:$0x10]
    %vm29 = vcmask 1044484
    %v30 = vsel %vm29, %v28, %v26
    %vm31 = vcmask 261120
    %32 = vst.msk [vmem:[%s1] sm:$0x1f] %vm31, %v30
    %s33 = scalar_lea.vmem [#allocation0], 3
    %v34 = vld [vmem:[%s33] ss:$8 sm:$0xf]
    %s35 = scalar_lea.vmem [#allocation0], 31
    %v36 = vld [vmem:[%s35] sm:$0x10]
    %vm37 = vcmask 1044484
    %v38 = vsel %vm37, %v36, %v34
    %39 = vrot.lane.b32.xlu0 %v38, 96
    %v40 = vpop.permute.xlu0 %39
    %vm41 = vcmask 1048320
    %42 = vst.msk [vmem:[%s1] sm:$0x1f] %vm41, %v40
    %s43 = scalar_lea.vmem [#allocation0], 2
    %v44 = vld [vmem:[%s43] ss:$8 sm:$0xf]
    %s45 = scalar_lea.vmem [#allocation0], 30
    %v46 = vld [vmem:[%s45] sm:$0x10]
    %vm47 = vcmask 1044484
    %v48 = vsel %vm47, %v46, %v44
    %49 = vrot.lane.b32.xlu0 %v48, 64
    %v50 = vpop.permute.xlu0 %49
    %vm51 = vcmask 785920
    %52 = vst.msk [vmem:[%s1] sm:$0x1f] %vm51, %v50
    %s53 = scalar_lea.vmem [#allocation0], 1
    %v54 = vld [vmem:[%s53] ss:$8 sm:$0xf]
    %s55 = scalar_lea.vmem [#allocation0], 29
    %v56 = vld [vmem:[%s55] sm:$0x10]
    %vm57 = vcmask 1044484
    %v58 = vsel %vm57, %v56, %v54
    %59 = vrot.lane.b32.xlu0 %v58, 32
    %v60 = vpop.permute.xlu0 %59
    %vm61 = vcmask 523520
    %62 = vst.msk [vmem:[%s1] sm:$0x1f] %vm61, %v60

// kernel: label2vec.1
$region0: #{label2vec.1}
  #allocation0 [shape = 'u32[]', space=smem, size = 0x4, offset = 0x4, fixed_abs, tag = 'smem constant byte address 0x4 - core index']
  #allocation1 [shape = 'u32[144,128]{1,0:T(1,128)}', space=vmem, size = 0x12000, scoped, tag = 'internal scratch']
  %s0 = inlined_call_operand.vmem [shape: s32[4,1], index: 0, kind: input, shape index: {}]
  %s1 = inlined_call_operand.vmem [shape: f32[5,128], index: 1, kind: input, shape index: {}]
  %s2 = inlined_call_operand.vmem [shape: f32[4,128], index: 2, kind: output, shape index: {}]
  %s3 = sld [smem:[#allocation0]]
  $region18: #{label2vec.1} parent=0
    _
  %s5 = ssub.s32 1, %s3
  %s6 = scalar_select 0, %s5, %s3
  // Predicated region
  $region2: #{label2vec.1} parent=0 // pred_check
    _
  $region3: #{label2vec.1} parent=0 // pred_check_branch
    %8 = sbr.rel (0) target = $region5
  $region4: #{label2vec.1} parent=0 // pred_region
    _
  $region5: #{label2vec.1} parent=0 // pred_fallthru
    _
  // Predicated region
  $region6: #{label2vec.1} parent=0 // pred_check
    _
  $region7: #{label2vec.1} parent=0 // pred_check_branch
    %10 = sbr.rel (0) target = $region9
  $region8: #{label2vec.1} parent=0 // pred_region
    _
  $region9: #{label2vec.1} parent=0 // pred_fallthru
    _
  %v11 = vlaneseq
  %v12 = vand.u32 %v11, 127
  %vm13 = vcmp.ge.s32.totalorder %v12, 32
  %v14 = vsel %vm13, 56, 7
  %v15 = vsel %vm13, 8, 1
  %vm16 = vcmp.ge.s32.totalorder %v12, 64
  %v17 = vsel %vm16, 448, %v14
  %v18 = vsel %vm16, 64, %v15
  %vm19 = vcmp.ge.s32.totalorder %v12, 96
  %v20 = vsel %vm19, 3584, %v17
  %v21 = vsel %vm19, 512, %v18
  %v22 = vld [vmem:[%s0] sm:$0xf]
  %23 = vset.pattern.permute.xlu0 0
  %24 = vperm.xlu0 %23, %v22
  %v25 = vpop.permute.xlu0 %24
  %v26 = vand.u32 %v25, %v20
  %v27 = vld [vmem:[%s1] sm:$0x1f]
  %v28 = vlaneseq
  %v29 = vshrl.u32 %v28, 7
  %v30 = vsub.s32 0, %v29
  %v31 = vrot.slane %v27, %v30
  %vm32 = vcmp.eq.s32.totalorder %v26, %v21
  %v33 = vlaneseq
  %v34 = vshrl.u32 %v33, 7
  %v35 = vsub.s32 1, %v34
  %v36 = vrot.slane %v27, %v35
  %v37 = vsel %vm32, %v36, %v31
  %v38 = vmul.u32 %v21, 2
  %vm39 = vcmp.eq.s32.totalorder %v26, %v38
  %v40 = vlaneseq
  %v41 = vshrl.u32 %v40, 7
  %v42 = vsub.s32 2, %v41
  %v43 = vrot.slane %v27, %v42
  %v44 = vsel %vm39, %v43, %v37
  %v45 = vmul.u32 %v21, 3
  %vm46 = vcmp.eq.s32.totalorder %v26, %v45
  %v47 = vlaneseq
  %v48 = vshrl.u32 %v47, 7
  %v49 = vsub.s32 3, %v48
  %v50 = vrot.slane %v27, %v49
  %v51 = vsel %vm46, %v50, %v44
  %v52 = vmul.u32 %v21, 4
  %vm53 = vcmp.eq.s32.totalorder %v26, %v52
  %v54 = vlaneseq
  %v55 = vshrl.u32 %v54, 7
  %v56 = vsub.s32 4, %v55
  %v57 = vrot.slane %v27, %v56
  %v58 = vsel %vm53, %v57, %v51
  %59 = vst [vmem:[%s2] sm:$0xf] %v58
  // Predicated region
  $region10: #{label2vec.1} parent=0 // pred_check
    _
  $region11: #{label2vec.1} parent=0 // pred_check_branch
    %61 = sbr.rel (0) target = $region13
  $region12: #{label2vec.1} parent=0 // pred_region
    _
  $region13: #{label2vec.1} parent=0 // pred_fallthru
    _
  // Predicated region
  $region14: #{label2vec.1} parent=0 // pred_check
    _
  $region15: #{label2vec.1} parent=0 // pred_check_branch
    %63 = sbr.rel (0) target = $region17
  $region16: #{label2vec.1} parent=0 // pred_region
    _
  $region17: #{label2vec.1} parent=0 // pred_fallthru
    _

</llo_original>
